<compile_context>
chip_gen: v7x
topology: tpu7x:2x2x1
jax: 0.10.0
libtpu: 0.0.40
codegen_flags: <defaults>
</compile_context>

<pallas_src>
import numpy as np
import jax
import jax.numpy as jnp
from jax.experimental import pallas as pl
from jax.experimental.pallas import tpu as pltpu


def _round_up(x, m):
    return ((x + m - 1) // m) * m


def gin_conv1_kernel(a_ref, xk_ref, xi_ref, w1_ref, b1_ref, w2_ref, b2_ref,
                     o_ref, acc_ref):
    """GINConv (sum aggregation, eps=0) + MLP1 = Linear -> ReLU -> Linear.

    Grid = (row tiles i, neighbor/contraction tiles k).
      a_ref  : (tm, tk)  adjacency tile A[i, k]
      xk_ref : (tk, Cp)  neighbor features X[k]
      xi_ref : (tm, Cp)  self features     X[i]
      w1_ref : (Cp, Hp)  b1_ref: (1, Hp)   first Linear (stored input-major)
      w2_ref : (Hp, Hp)  b2_ref: (1, Hp)   second Linear
      o_ref  : (tm, Hp)  output tile (written at k == last)
      acc_ref: (tm, Cp)  f32 accumulator for sum_k A[i,k] @ X[k]
    """
    k = pl.program_id(1)

    @pl.when(k == 0)
    def _():
        acc_ref[...] = jnp.zeros_like(acc_ref)

    acc_ref[...] += jnp.dot(a_ref[...], xk_ref[...],
                            preferred_element_type=jnp.float32)

    @pl.when(k == pl.num_programs(1) - 1)
    def _():
        # (1 + eps) * x_i + sum_j A_ij x_j  with eps = 0 (DGL default)
        agg = acc_ref[...] + xi_ref[...]
        h = jnp.dot(agg, w1_ref[...], preferred_element_type=jnp.float32) + b1_ref[...]
        h = jnp.maximum(h, 0.0)
        o_ref[...] = (jnp.dot(h, w2_ref[...], preferred_element_type=jnp.float32)
                      + b2_ref[...]).astype(o_ref.dtype)


def gin_forward(a, x, w1, b1, w2, b2):
    """a: (N, N) binary adjacency; x: (N, Cin); w*: (in, out); b*: (out,)."""
    N, Cin = x.shape
    H = w1.shape[1]
    f32 = jnp.float32

    # Lane-dense padding of the feature axes (multiple of 128).
    Cp = _round_up(Cin, 128)
    Hp = _round_up(H, 128)

    # Node axis padded to a 128-aligned tile grid; largest tile that divides Np.
    Np = _round_up(N, 128)
    tile = next(t for t in (512, 256, 128) if Np % t == 0)
    tm = tk = tile

    ap = jnp.zeros((Np, Np), f32).at[:N, :N].set(a.astype(f32))
    xp = jnp.zeros((Np, Cp), f32).at[:N, :Cin].set(x.astype(f32))
    w1p = jnp.zeros((Cp, Hp), f32).at[:Cin, :H].set(w1.astype(f32))
    b1p = jnp.zeros((1, Hp), f32).at[0, :H].set(b1.astype(f32))
    w2p = jnp.zeros((Hp, Hp), f32).at[:H, :H].set(w2.astype(f32))
    b2p = jnp.zeros((1, Hp), f32).at[0, :H].set(b2.astype(f32))

    flops = int(2 * Np * Np * Cp + 2 * Np * Cp * Hp + 2 * Np * Hp * Hp)
    bytes_accessed = int(4 * (Np * Np + 2 * Np * Cp + Cp * Hp
                              + Hp * Hp + 2 * Hp + Np * Hp))

    out_padded = pl.pallas_call(
        gin_conv1_kernel,
        out_shape=jax.ShapeDtypeStruct((Np, Hp), f32),
        grid_spec=pltpu.PrefetchScalarGridSpec(
            num_scalar_prefetch=0,
            grid=(Np // tm, Np // tk),
            in_specs=[
                pl.BlockSpec((tm, tk), lambda i, k: (i, k)),   # A[i, k]
                pl.BlockSpec((tk, Cp), lambda i, k: (k, 0)),   # X neighbor block
                pl.BlockSpec((tm, Cp), lambda i, k: (i, 0)),   # X self block
                pl.BlockSpec((Cp, Hp), lambda i, k: (0, 0)),   # W1
                pl.BlockSpec((1, Hp),  lambda i, k: (0, 0)),   # b1
                pl.BlockSpec((Hp, Hp), lambda i, k: (0, 0)),   # W2
                pl.BlockSpec((1, Hp),  lambda i, k: (0, 0)),   # b2
            ],
            out_specs=pl.BlockSpec((tm, Hp), lambda i, k: (i, 0)),
            scratch_shapes=[pltpu.VMEM((tm, Cp), jnp.float32)],
        ),
        compiler_params=pltpu.CompilerParams(
            dimension_semantics=("parallel", "arbitrary"),
            vmem_limit_bytes=32 * 1024 * 1024,
        ),
        cost_estimate=pl.CostEstimate(
            flops=flops, transcendentals=0, bytes_accessed=bytes_accessed),
    )(ap, xp, xp, w1p, b1p, w2p, b2p)

    return out_padded[:N, :H]


def build_adjacency(N):
    """Deterministic small graph: ring + a few chords, symmetric, no self-loops.
    Binary (unnormalized) adjacency -> GIN sum aggregation."""
    A = np.zeros((N, N), dtype=np.float32)
    for i in range(N):
        j = (i + 1) % N
        A[i, j] = 1.0
        A[j, i] = 1.0
    for i in range(0, N, 3):
        j = (i + N // 2) % N
        if i != j:
            A[i, j] = 1.0
            A[j, i] = 1.0
    return jnp.asarray(A, dtype=jnp.float32)


if __name__ == "__main__":
    # Small shapes consistent with the module: N nodes, in_feats features, h_feats hidden.
    N, in_feats, h_feats = 32, 16, 32

    key = jax.random.PRNGKey(0)
    k_x, k_w1, k_b1, k_w2, k_b2 = jax.random.split(key, 5)

    x = jax.random.normal(k_x, (N, in_feats), dtype=jnp.float32)

    # Deterministic parameter init, stored input-major (in, out)
    # (PyTorch Linear stores (out, in); equivalent to using W.T).
    w1 = jax.random.normal(k_w1, (in_feats, h_feats), dtype=jnp.float32) / np.sqrt(in_feats)
    b1 = jax.random.normal(k_b1, (h_feats,), dtype=jnp.float32) * 0.01
    w2 = jax.random.normal(k_w2, (h_feats, h_feats), dtype=jnp.float32) / np.sqrt(h_feats)
    b2 = jax.random.normal(k_b2, (h_feats,), dtype=jnp.float32) * 0.01

    a = build_adjacency(N)

    out = gin_forward(a, x, w1, b1, w2, b2)
    out = jax.block_until_ready(out)

    # Pure-JAX reference: GINConv(sum, eps=0) + MLP1.
    agg = x + a @ x
    h = jnp.maximum(agg @ w1 + b1, 0.0)
    ref = h @ w2 + b2
    np.testing.assert_allclose(np.asarray(out), np.asarray(ref), rtol=1e-5, atol=1e-5)

    print("KERNEL_OK")
</pallas_src>

<mosaic_0001>
module attributes {stable_mosaic.version = 11 : i64} {
  func.func @gin_conv1_kernel(%arg0: i32, %arg1: i32, %arg2: memref<128x128xf32, #tpu.memory_space<vmem>>, %arg3: memref<128x128xf32, #tpu.memory_space<vmem>>, %arg4: memref<128x128xf32, #tpu.memory_space<vmem>>, %arg5: memref<128x128xf32, #tpu.memory_space<vmem>>, %arg6: memref<1x128xf32, #tpu.memory_space<vmem>>, %arg7: memref<128x128xf32, #tpu.memory_space<vmem>>, %arg8: memref<1x128xf32, #tpu.memory_space<vmem>>, %arg9: memref<128x128xf32, #tpu.memory_space<vmem>>, %arg10: memref<128x128xf32, #tpu.memory_space<vmem>>) attributes {dimension_semantics = [#tpu.dimension_semantics<parallel>, #tpu.dimension_semantics<arbitrary>], iteration_bounds = array<i64: 1, 1>, scalar_prefetch = 0 : i64, scratch_operands = 1 : i64, tpu.core_type = #tpu.core_type<tc>, window_params = [{transform_indices = @transform_0, window_bounds = array<i64: 128, 128>}, {transform_indices = @transform_1, window_bounds = array<i64: 128, 128>}, {transform_indices = @transform_2, window_bounds = array<i64: 128, 128>}, {pipeline_mode = #tpu.pipeline_mode<synchronous>, transform_indices = @transform_3, window_bounds = array<i64: 128, 128>}, {pipeline_mode = #tpu.pipeline_mode<synchronous>, transform_indices = @transform_4, window_bounds = array<i64: 1, 128>}, {pipeline_mode = #tpu.pipeline_mode<synchronous>, transform_indices = @transform_5, window_bounds = array<i64: 128, 128>}, {pipeline_mode = #tpu.pipeline_mode<synchronous>, transform_indices = @transform_6, window_bounds = array<i64: 1, 128>}, {transform_indices = @transform_7, window_bounds = array<i64: 128, 128>}]} {
    %c0_i32 = arith.constant 0 : i32
    %0 = arith.cmpi eq, %arg1, %c0_i32 : i32
    %1 = arith.extui %0 : i1 to i32
    %c0_i32_0 = arith.constant 0 : i32
    %2 = arith.cmpi ne, %1, %c0_i32_0 : i32
    scf.if %2 {
      %cst_10 = arith.constant 0.000000e+00 : f32
      %12 = vector.broadcast %cst_10 : f32 to vector<128x128xf32>
      %c0_11 = arith.constant 0 : index
      %c0_12 = arith.constant 0 : index
      %13 = vector.load %arg10[%c0_11, %c0_12] : memref<128x128xf32, #tpu.memory_space<vmem>>, vector<128x128xf32>
      tpu.vector_store %arg10[%c0_11, %c0_12], %12 {strides = array<i32>} : memref<128x128xf32, #tpu.memory_space<vmem>>, vector<128x128xf32>,
    } else {
    }
    %c0 = arith.constant 0 : index
    %c0_1 = arith.constant 0 : index
    %3 = vector.load %arg10[%c0, %c0_1] : memref<128x128xf32, #tpu.memory_space<vmem>>, vector<128x128xf32>
    %c0_2 = arith.constant 0 : index
    %c0_3 = arith.constant 0 : index
    %4 = vector.load %arg2[%c0_2, %c0_3] : memref<128x128xf32, #tpu.memory_space<vmem>>, vector<128x128xf32>
    %c0_4 = arith.constant 0 : index
    %c0_5 = arith.constant 0 : index
    %5 = vector.load %arg3[%c0_4, %c0_5] : memref<128x128xf32, #tpu.memory_space<vmem>>, vector<128x128xf32>
    %cst = arith.constant dense<0.000000e+00> : vector<128x128xf32>
    %6 = tpu.matmul %4, %5, %cst {dimension_numbers = #tpu.dot_dimension_numbers<[1], [0], [0], [1], [0, 0, 1, 1], [], []>} : vector<128x128xf32>, vector<128x128xf32>, vector<128x128xf32> -> vector<128x128xf32>
    %7 = arith.addf %3, %6 : vector<128x128xf32>
    %c0_6 = arith.constant 0 : index
    %c0_7 = arith.constant 0 : index
    %8 = vector.load %arg10[%c0_6, %c0_7] : memref<128x128xf32, #tpu.memory_space<vmem>>, vector<128x128xf32>
    tpu.vector_store %arg10[%c0_6, %c0_7], %7 {strides = array<i32>} : memref<128x128xf32, #tpu.memory_space<vmem>>, vector<128x128xf32>,
    %c0_i32_8 = arith.constant 0 : i32
    %9 = arith.cmpi eq, %arg1, %c0_i32_8 : i32
    %10 = arith.extui %9 : i1 to i32
    %c0_i32_9 = arith.constant 0 : i32
    %11 = arith.cmpi ne, %10, %c0_i32_9 : i32
    scf.if %11 {
      %c0_10 = arith.constant 0 : index
      %c0_11 = arith.constant 0 : index
      %12 = vector.load %arg10[%c0_10, %c0_11] : memref<128x128xf32, #tpu.memory_space<vmem>>, vector<128x128xf32>
      %c0_12 = arith.constant 0 : index
      %c0_13 = arith.constant 0 : index
      %13 = vector.load %arg4[%c0_12, %c0_13] : memref<128x128xf32, #tpu.memory_space<vmem>>, vector<128x128xf32>
      %14 = arith.addf %12, %13 : vector<128x128xf32>
      %c0_14 = arith.constant 0 : index
      %c0_15 = arith.constant 0 : index
      %15 = vector.load %arg5[%c0_14, %c0_15] : memref<128x128xf32, #tpu.memory_space<vmem>>, vector<128x128xf32>
      %cst_16 = arith.constant dense<0.000000e+00> : vector<128x128xf32>
      %16 = tpu.matmul %14, %15, %cst_16 {dimension_numbers = #tpu.dot_dimension_numbers<[1], [0], [0], [1], [0, 0, 1, 1], [], []>} : vector<128x128xf32>, vector<128x128xf32>, vector<128x128xf32> -> vector<128x128xf32>
      %c0_17 = arith.constant 0 : index
      %c0_18 = arith.constant 0 : index
      %17 = vector.load %arg6[%c0_17, %c0_18] : memref<1x128xf32, #tpu.memory_space<vmem>>, vector<1x128xf32>
      %18 = vector.broadcast %17 : vector<1x128xf32> to vector<128x128xf32>
      %19 = arith.addf %16, %18 : vector<128x128xf32>
      %cst_19 = arith.constant 0.000000e+00 : f32
      %20 = vector.broadcast %cst_19 : f32 to vector<128x128xf32>
      %21 = arith.maximumf %19, %20 : vector<128x128xf32>
      %c0_20 = arith.constant 0 : index
      %c0_21 = arith.constant 0 : index
      %22 = vector.load %arg7[%c0_20, %c0_21] : memref<128x128xf32, #tpu.memory_space<vmem>>, vector<128x128xf32>
      %cst_22 = arith.constant dense<0.000000e+00> : vector<128x128xf32>
      %23 = tpu.matmul %21, %22, %cst_22 {dimension_numbers = #tpu.dot_dimension_numbers<[1], [0], [0], [1], [0, 0, 1, 1], [], []>} : vector<128x128xf32>, vector<128x128xf32>, vector<128x128xf32> -> vector<128x128xf32>
      %c0_23 = arith.constant 0 : index
      %c0_24 = arith.constant 0 : index
      %24 = vector.load %arg8[%c0_23, %c0_24] : memref<1x128xf32, #tpu.memory_space<vmem>>, vector<1x128xf32>
      %25 = vector.broadcast %24 : vector<1x128xf32> to vector<128x128xf32>
      %26 = arith.addf %23, %25 : vector<128x128xf32>
      %c0_25 = arith.constant 0 : index
      %c0_26 = arith.constant 0 : index
      %27 = vector.load %arg9[%c0_25, %c0_26] : memref<128x128xf32, #tpu.memory_space<vmem>>, vector<128x128xf32>
      tpu.vector_store %arg9[%c0_25, %c0_26], %26 {strides = array<i32>} : memref<128x128xf32, #tpu.memory_space<vmem>>, vector<128x128xf32>,
    } else {
    }
    return
  }
  func.func @transform_0(%arg0: i32, %arg1: i32) -> (i32, i32) {
    %c0_i32 = arith.constant 0 : i32
    return %arg0, %arg1 : i32, i32
  }
  func.func @transform_1(%arg0: i32, %arg1: i32) -> (i32, i32) {
    %c0_i32 = arith.constant 0 : i32
    %c0_i32_0 = arith.constant 0 : i32
    return %arg1, %c0_i32 : i32, i32
  }
  func.func @transform_2(%arg0: i32, %arg1: i32) -> (i32, i32) {
    %c0_i32 = arith.constant 0 : i32
    %c0_i32_0 = arith.constant 0 : i32
    return %arg0, %c0_i32 : i32, i32
  }
  func.func @transform_3(%arg0: i32, %arg1: i32) -> (i32, i32) {
    %c0_i32 = arith.constant 0 : i32
    %c0_i32_0 = arith.constant 0 : i32
    %c0_i32_1 = arith.constant 0 : i32
    return %c0_i32, %c0_i32_0 : i32, i32
  }
  func.func @transform_4(%arg0: i32, %arg1: i32) -> (i32, i32) {
    %c0_i32 = arith.constant 0 : i32
    %c0_i32_0 = arith.constant 0 : i32
    %c0_i32_1 = arith.constant 0 : i32
    return %c0_i32, %c0_i32_0 : i32, i32
  }
  func.func @transform_5(%arg0: i32, %arg1: i32) -> (i32, i32) {
    %c0_i32 = arith.constant 0 : i32
    %c0_i32_0 = arith.constant 0 : i32
    %c0_i32_1 = arith.constant 0 : i32
    return %c0_i32, %c0_i32_0 : i32, i32
  }
  func.func @transform_6(%arg0: i32, %arg1: i32) -> (i32, i32) {
    %c0_i32 = arith.constant 0 : i32
    %c0_i32_0 = arith.constant 0 : i32
    %c0_i32_1 = arith.constant 0 : i32
    return %c0_i32, %c0_i32_0 : i32, i32
  }
  func.func @transform_7(%arg0: i32, %arg1: i32) -> (i32, i32) {
    %c0_i32 = arith.constant 0 : i32
    %c0_i32_0 = arith.constant 0 : i32
    return %arg0, %c0_i32 : i32, i32
  }
}

</mosaic_0001>

<llo_original>
// kernel: tpu_custom_call.1
$region0: #{tpu_custom_call.1}
  #allocation0 [shape = 'u32[]', space=smem, size = 0x4, offset = 0x4, fixed_abs, tag = 'smem constant byte address 0x4 - core index']
  #allocation1 [shape = 'u32[144,128]{1,0:T(1,128)}', space=vmem, size = 0x12000, scoped, tag = 'internal scratch']
  #allocation2 [shape = 'f32[128,128]{1,0:T(8,128)}', space=vmem, size = 0x10000, scoped, tag = 'scratch operand']
  %s0 = inlined_call_operand.hbm [shape: f32[128,128], index: 0, kind: input, shape index: {}]
  %s1 = inlined_call_operand.hbm [shape: f32[128,128], index: 1, kind: input, shape index: {}]
  %s2 = inlined_call_operand.hbm [shape: f32[128,128], index: 2, kind: input, shape index: {}]
  %s3 = inlined_call_operand.hbm [shape: f32[128,128], index: 3, kind: input, shape index: {}]
  %s4 = inlined_call_operand.vmem [shape: f32[1,128], index: 4, kind: input, shape index: {}]
  %s5 = inlined_call_operand.hbm [shape: f32[128,128], index: 5, kind: input, shape index: {}]
  %s6 = inlined_call_operand.vmem [shape: f32[1,128], index: 6, kind: input, shape index: {}]
  %s7 = inlined_call_operand.hbm [shape: f32[128,128], index: 7, kind: output, shape index: {}]
  %s8 = sld [smem:[#allocation0]]
  $region66: #{tpu_custom_call.1} parent=0
    _
  %s10 = ssub.s32 1, %s8
  %s11 = scalar_select 0, %s10, %s8
  $region1: #{tpu_custom_call.1} parent=0
    #allocation3 [shape = 'u8[65536]{0}', space=vmem, size = 0x10000, scoped, tag = 'input window, operand 0, single buffered']
    #allocation4 [shape = 's32[1]{0}', space=sflag, size = 0x4, scoped, tag = 'scoped memory for tpu_custom_call.1']
    #allocation5 [shape = 's32[1]{0}', space=sflag, size = 0x4, scoped, tag = 'scoped memory for tpu_custom_call.1']
    #allocation6 [shape = 'u8[65536]{0}', space=vmem, size = 0x10000, scoped, tag = 'input window, operand 1, single buffered']
    #allocation7 [shape = 's32[1]{0}', space=sflag, size = 0x4, scoped, tag = 'scoped memory for tpu_custom_call.1']
    #allocation8 [shape = 'u8[65536]{0}', space=vmem, size = 0x10000, scoped, tag = 'input window, operand 2, single buffered']
    #allocation9 [shape = 'u8[65536]{0}', space=vmem, size = 0x10000, scoped, tag = 'input window, operand 3, single buffered']
    #allocation10 [shape = 's32[1]{0}', space=sflag, size = 0x4, scoped, tag = 'scoped memory for tpu_custom_call.1']
    #allocation11 [shape = 'u8[65536]{0}', space=vmem, size = 0x10000, scoped, tag = 'input window, operand 5, single buffered']
    #allocation12 [shape = 'u8[65536]{0}', space=vmem, size = 0x10000, scoped, tag = 'output window, operand 0, single buffered']
    %12 = vsyncpa [#allocation4], 0
    %13 = vsyncpa [#allocation7], 0
    %14 = vsyncpa [#allocation10], 0
    %15 = vsyncpa [#allocation5], 0
    // Predicated region
    $region2: #{tpu_custom_call.1} parent=1 // pred_check
      _
    $region3: #{tpu_custom_call.1} parent=1 // pred_check_branch
      %17 = sbr.rel (0) target = $region5
    $region4: #{tpu_custom_call.1} parent=1 // pred_region
      %s19 = ssub.s32 2048, 2048
      %20 = vsyncadd [#allocation4], %s19
      %s21 = sshll.u32 [#allocation3], 4
      %s22 = int_to_ptr.vmem [resolvable:$true] %s21
      %27 = dma.hbm_to_vmem [thread:$0]  %s0, 2048, %s22, [#allocation4], 128, 128, 8
    $region5: #{tpu_custom_call.1} parent=1 // pred_fallthru
      _
    // Predicated region
    $region6: #{tpu_custom_call.1} parent=1 // pred_check
      _
    $region7: #{tpu_custom_call.1} parent=1 // pred_check_branch
      %29 = sbr.rel (0) target = $region9
    $region8: #{tpu_custom_call.1} parent=1 // pred_region
      %s31 = ssub.s32 2048, 2048
      %32 = vsyncadd [#allocation7], %s31
      %s33 = sshll.u32 [#allocation6], 4
      %s34 = int_to_ptr.vmem [resolvable:$true] %s33
      %39 = dma.hbm_to_vmem [thread:$0]  %s1, 2048, %s34, [#allocation7], 128, 128, 8
    $region9: #{tpu_custom_call.1} parent=1 // pred_fallthru
      _
    // Predicated region
    $region10: #{tpu_custom_call.1} parent=1 // pred_check
      _
    $region11: #{tpu_custom_call.1} parent=1 // pred_check_branch
      %41 = sbr.rel (0) target = $region13
    $region12: #{tpu_custom_call.1} parent=1 // pred_region
      %s43 = ssub.s32 2048, 2048
      %44 = vsyncadd [#allocation7], %s43
      %s45 = sshll.u32 [#allocation8], 4
      %s46 = int_to_ptr.vmem [resolvable:$true] %s45
      %51 = dma.hbm_to_vmem [thread:$0]  %s2, 2048, %s46, [#allocation7], 128, 128, 8
    $region13: #{tpu_custom_call.1} parent=1 // pred_fallthru
      _
    // Predicated region
    $region14: #{tpu_custom_call.1} parent=1 // pred_check
      _
    $region15: #{tpu_custom_call.1} parent=1 // pred_check_branch
      %53 = sbr.rel (0) target = $region17
    $region16: #{tpu_custom_call.1} parent=1 // pred_region
      %s55 = ssub.s32 2048, 2048
      %56 = vsyncadd [#allocation10], %s55
      %s57 = sshll.u32 [#allocation9], 4
      %s58 = int_to_ptr.vmem [resolvable:$true] %s57
      %63 = dma.hbm_to_vmem [thread:$0]  %s3, 2048, %s58, [#allocation10], 128, 128, 8
    $region17: #{tpu_custom_call.1} parent=1 // pred_fallthru
      _
    // Predicated region
    $region18: #{tpu_custom_call.1} parent=1 // pred_check
      _
    $region19: #{tpu_custom_call.1} parent=1 // pred_check_branch
      %65 = sbr.rel (0) target = $region21
    $region20: #{tpu_custom_call.1} parent=1 // pred_region
      _
    $region21: #{tpu_custom_call.1} parent=1 // pred_fallthru
      _
    // Predicated region
    $region22: #{tpu_custom_call.1} parent=1 // pred_check
      _
    $region23: #{tpu_custom_call.1} parent=1 // pred_check_branch
      %67 = sbr.rel (0) target = $region25
    $region24: #{tpu_custom_call.1} parent=1 // pred_region
      %s69 = ssub.s32 2048, 2048
      %70 = vsyncadd [#allocation10], %s69
      %s71 = sshll.u32 [#allocation11], 4
      %s72 = int_to_ptr.vmem [resolvable:$true] %s71
      %77 = dma.hbm_to_vmem [thread:$0]  %s5, 2048, %s72, [#allocation10], 128, 128, 8
    $region25: #{tpu_custom_call.1} parent=1 // pred_fallthru
      _
    // Predicated region
    $region26: #{tpu_custom_call.1} parent=1 // pred_check
      _
    $region27: #{tpu_custom_call.1} parent=1 // pred_check_branch
      %79 = sbr.rel (0) target = $region29
    $region28: #{tpu_custom_call.1} parent=1 // pred_region
      _
    $region29: #{tpu_custom_call.1} parent=1 // pred_fallthru
      _
    // Predicated region
    $region30: #{tpu_custom_call.1} parent=1 // pred_check
      _
    $region31: #{tpu_custom_call.1} parent=1 // pred_check_branch
      %81 = sbr.rel (0) target = $region33
    $region32: #{tpu_custom_call.1} parent=1 // pred_region
      %82 = dma.done [#allocation4], 2048
    $region33: #{tpu_custom_call.1} parent=1 // pred_fallthru
      _
    // Predicated region
    $region34: #{tpu_custom_call.1} parent=1 // pred_check
      _
    $region35: #{tpu_custom_call.1} parent=1 // pred_check_branch
      %84 = sbr.rel (0) target = $region37
    $region36: #{tpu_custom_call.1} parent=1 // pred_region
      %85 = dma.done [#allocation7], 2048
    $region37: #{tpu_custom_call.1} parent=1 // pred_fallthru
      _
    // Predicated region
    $region38: #{tpu_custom_call.1} parent=1 // pred_check
      _
    $region39: #{tpu_custom_call.1} parent=1 // pred_check_branch
      %87 = sbr.rel (0) target = $region41
    $region40: #{tpu_custom_call.1} parent=1 // pred_region
      %88 = dma.done [#allocation7], 2048
    $region41: #{tpu_custom_call.1} parent=1 // pred_fallthru
      _
    // Predicated region
    $region42: #{tpu_custom_call.1} parent=1 // pred_check
      _
    $region43: #{tpu_custom_call.1} parent=1 // pred_check_branch
      %90 = sbr.rel (0) target = $region45
    $region44: #{tpu_custom_call.1} parent=1 // pred_region
      %91 = dma.done [#allocation10], 2048
    $region45: #{tpu_custom_call.1} parent=1 // pred_fallthru
      _
    // Predicated region
    $region46: #{tpu_custom_call.1} parent=1 // pred_check
      _
    $region47: #{tpu_custom_call.1} parent=1 // pred_check_branch
      %93 = sbr.rel (0) target = $region49
    $region48: #{tpu_custom_call.1} parent=1 // pred_region
      %94 = dma.done [#allocation10], 2048
    $region49: #{tpu_custom_call.1} parent=1 // pred_fallthru
      _
    %p95 = scmp.eq.s32.totalorder 0, 0
    // Predicated region
    $region50: #{tpu_custom_call.1} parent=1 // pred_check
      %p96 = pneg %p95
    $region51: #{tpu_custom_call.1} parent=1 // pred_check_branch
      %98 = sbr.rel (%p96) target = $region53
    $region52: #{tpu_custom_call.1} parent=1 // pred_region
      %99 = vst [vmem:[#allocation2] sm:$0xff] 0.0
      %100 = vst [vmem:[#allocation2 + $0x8] sm:$0xff] 0.0
      %101 = vst [vmem:[#allocation2 + $0x10] sm:$0xff] 0.0
      %102 = vst [vmem:[#allocation2 + $0x18] sm:$0xff] 0.0
      %103 = vst [vmem:[#allocation2 + $0x20] sm:$0xff] 0.0
      %104 = vst [vmem:[#allocation2 + $0x28] sm:$0xff] 0.0
      %105 = vst [vmem:[#allocation2 + $0x30] sm:$0xff] 0.0
      %106 = vst [vmem:[#allocation2 + $0x38] sm:$0xff] 0.0
      %107 = vst [vmem:[#allocation2 + $0x40] sm:$0xff] 0.0
      %108 = vst [vmem:[#allocation2 + $0x48] sm:$0xff] 0.0
      %109 = vst [vmem:[#allocation2 + $0x50] sm:$0xff] 0.0
      %110 = vst [vmem:[#allocation2 + $0x58] sm:$0xff] 0.0
      %111 = vst [vmem:[#allocation2 + $0x60] sm:$0xff] 0.0
      %112 = vst [vmem:[#allocation2 + $0x68] sm:$0xff] 0.0
      %113 = vst [vmem:[#allocation2 + $0x70] sm:$0xff] 0.0
      %114 = vst [vmem:[#allocation2 + $0x78] sm:$0xff] 0.0
    $region53: #{tpu_custom_call.1} parent=1 // pred_fallthru
      _
    %v115 = vld [vmem:[#allocation2] sm:$0xff]
    %v116 = vld [vmem:[#allocation2 + $0x8] sm:$0xff]
    %v117 = vld [vmem:[#allocation2 + $0x10] sm:$0xff]
    %v118 = vld [vmem:[#allocation2 + $0x18] sm:$0xff]
    %v119 = vld [vmem:[#allocation2 + $0x20] sm:$0xff]
    %v120 = vld [vmem:[#allocation2 + $0x28] sm:$0xff]
    %v121 = vld [vmem:[#allocation2 + $0x30] sm:$0xff]
    %v122 = vld [vmem:[#allocation2 + $0x38] sm:$0xff]
    %v123 = vld [vmem:[#allocation2 + $0x40] sm:$0xff]
    %v124 = vld [vmem:[#allocation2 + $0x48] sm:$0xff]
    %v125 = vld [vmem:[#allocation2 + $0x50] sm:$0xff]
    %v126 = vld [vmem:[#allocation2 + $0x58] sm:$0xff]
    %v127 = vld [vmem:[#allocation2 + $0x60] sm:$0xff]
    %v128 = vld [vmem:[#allocation2 + $0x68] sm:$0xff]
    %v129 = vld [vmem:[#allocation2 + $0x70] sm:$0xff]
    %v130 = vld [vmem:[#allocation2 + $0x78] sm:$0xff]
    %v131 = vld [vmem:[#allocation3] sm:$0xff]
    %v132 = vld [vmem:[#allocation3 + $0x8] sm:$0xff]
    %v133 = vld [vmem:[#allocation3 + $0x10] sm:$0xff]
    %v134 = vld [vmem:[#allocation3 + $0x18] sm:$0xff]
    %v135 = vld [vmem:[#allocation3 + $0x20] sm:$0xff]
    %v136 = vld [vmem:[#allocation3 + $0x28] sm:$0xff]
    %v137 = vld [vmem:[#allocation3 + $0x30] sm:$0xff]
    %v138 = vld [vmem:[#allocation3 + $0x38] sm:$0xff]
    %v139 = vld [vmem:[#allocation3 + $0x40] sm:$0xff]
    %v140 = vld [vmem:[#allocation3 + $0x48] sm:$0xff]
    %v141 = vld [vmem:[#allocation3 + $0x50] sm:$0xff]
    %v142 = vld [vmem:[#allocation3 + $0x58] sm:$0xff]
    %v143 = vld [vmem:[#allocation3 + $0x60] sm:$0xff]
    %v144 = vld [vmem:[#allocation3 + $0x68] sm:$0xff]
    %v145 = vld [vmem:[#allocation3 + $0x70] sm:$0xff]
    %v146 = vld [vmem:[#allocation3 + $0x78] sm:$0xff]
    %v147 = vld [vmem:[#allocation6] sm:$0xff]
    %v148 = vld [vmem:[#allocation6 + $0x8] sm:$0xff]
    %v149 = vld [vmem:[#allocation6 + $0x10] sm:$0xff]
    %v150 = vld [vmem:[#allocation6 + $0x18] sm:$0xff]
    %v151 = vld [vmem:[#allocation6 + $0x20] sm:$0xff]
    %v152 = vld [vmem:[#allocation6 + $0x28] sm:$0xff]
    %v153 = vld [vmem:[#allocation6 + $0x30] sm:$0xff]
    %v154 = vld [vmem:[#allocation6 + $0x38] sm:$0xff]
    %v155 = vld [vmem:[#allocation6 + $0x40] sm:$0xff]
    %v156 = vld [vmem:[#allocation6 + $0x48] sm:$0xff]
    %v157 = vld [vmem:[#allocation6 + $0x50] sm:$0xff]
    %v158 = vld [vmem:[#allocation6 + $0x58] sm:$0xff]
    %v159 = vld [vmem:[#allocation6 + $0x60] sm:$0xff]
    %v160 = vld [vmem:[#allocation6 + $0x68] sm:$0xff]
    %v161 = vld [vmem:[#allocation6 + $0x70] sm:$0xff]
    %v162 = vld [vmem:[#allocation6 + $0x78] sm:$0xff]
    %163 = vmatprep.subr.mxu0 0.0
    %164 = vmatpush1.msra.mxu0 %v147
    %165 = vmatprep.subr.mxu0 0.0
    %166 = vmatpush1.msra.mxu0 %v148
    %167 = vmatprep.subr.mxu0 0.0
    %168 = vmatpush1.msra.mxu0 %v149
    %169 = vmatprep.subr.mxu0 0.0
    %170 = vmatpush1.msra.mxu0 %v150
    %171 = vmatprep.subr.mxu0 0.0
    %172 = vmatpush1.msra.mxu0 %v151
    %173 = vmatprep.subr.mxu0 0.0
    %174 = vmatpush1.msra.mxu0 %v152
    %175 = vmatprep.subr.mxu0 0.0
    %176 = vmatpush1.msra.mxu0 %v153
    %177 = vmatprep.subr.mxu0 0.0
    %178 = vmatpush1.msra.mxu0 %v154
    %179 = vmatprep.subr.mxu0 0.0
    %180 = vmatpush1.msra.mxu0 %v155
    %181 = vmatprep.subr.mxu0 0.0
    %182 = vmatpush1.msra.mxu0 %v156
    %183 = vmatprep.subr.mxu0 0.0
    %184 = vmatpush1.msra.mxu0 %v157
    %185 = vmatprep.subr.mxu0 0.0
    %186 = vmatpush1.msra.mxu0 %v158
    %187 = vmatprep.subr.mxu0 0.0
    %188 = vmatpush1.msra.mxu0 %v159
    %189 = vmatprep.subr.mxu0 0.0
    %190 = vmatpush1.msra.mxu0 %v160
    %191 = vmatprep.subr.mxu0 0.0
    %192 = vmatpush1.msra.mxu0 %v161
    %193 = vmatprep.subr.mxu0 0.0
    %194 = vmatpush1.msra.mxu0 %v162
    %195 = vmatprep.subr.mxu0 0.0
    %196 = vmatpush1.msra.mxu0 0.0
    %197 = vmatprep.subr.mxu0 0.0
    %198 = vmatpush1.msra.mxu0 0.0
    %199 = vmatprep.subr.mxu0 0.0
    %200 = vmatpush1.msra.mxu0 0.0
    %201 = vmatprep.subr.mxu0 0.0
    %202 = vmatpush1.msra.mxu0 0.0
    %203 = vmatprep.subr.mxu0 0.0
    %204 = vmatpush1.msra.mxu0 0.0
    %205 = vmatprep.subr.mxu0 0.0
    %206 = vmatpush1.msra.mxu0 0.0
    %207 = vmatprep.subr.mxu0 0.0
    %208 = vmatpush1.msra.mxu0 0.0
    %209 = vmatprep.subr.mxu0 0.0
    %210 = vmatpush1.msra.mxu0 0.0
    %211 = vmatprep.subr.mxu0 0.0
    %212 = vmatpush1.msra.mxu0 0.0
    %213 = vmatprep.subr.mxu0 0.0
    %214 = vmatpush1.msra.mxu0 0.0
    %215 = vmatprep.subr.mxu0 0.0
    %216 = vmatpush1.msra.mxu0 0.0
    %217 = vmatprep.subr.mxu0 0.0
    %218 = vmatpush1.msra.mxu0 0.0
    %219 = vmatprep.subr.mxu0 0.0
    %220 = vmatpush1.msra.mxu0 0.0
    %221 = vmatprep.subr.mxu0 0.0
    %222 = vmatpush1.msra.mxu0 0.0
    %223 = vmatprep.subr.mxu0 0.0
    %224 = vmatpush1.msra.mxu0 0.0
    %225 = vmatprep.subr.mxu0 0.0
    %226 = vmatpush1.msra.mxu0 0.0
    %227 = vmatprep.mubr.f32.mxu0 0.0
    %228 = vmatmul.mubr.f32.gmra.mrb[0].mxu0 %v131
    %v229 = vpop.f32.mrb[0].mxu0
    %v230 = vadd.f32 0.0, %v229
    %v231 = vpop.f32.mrb[0].mxu0
    %232 = vmatprep.mubr.f32.mxu0 0.0
    %233 = vmatmul.mubr.f32.gmra.mrb[0].mxu0 %v132
    %v234 = vpop.f32.mrb[0].mxu0
    %v235 = vadd.f32 0.0, %v234
    %v236 = vpop.f32.mrb[0].mxu0
    %237 = vmatprep.mubr.f32.mxu0 0.0
    %238 = vmatmul.mubr.f32.gmra.mrb[0].mxu0 %v133
    %v239 = vpop.f32.mrb[0].mxu0
    %v240 = vadd.f32 0.0, %v239
    %v241 = vpop.f32.mrb[0].mxu0
    %242 = vmatprep.mubr.f32.mxu0 0.0
    %243 = vmatmul.mubr.f32.gmra.mrb[0].mxu0 %v134
    %v244 = vpop.f32.mrb[0].mxu0
    %v245 = vadd.f32 0.0, %v244
    %v246 = vpop.f32.mrb[0].mxu0
    %247 = vmatprep.mubr.f32.mxu0 0.0
    %248 = vmatmul.mubr.f32.gmra.mrb[0].mxu0 %v135
    %v249 = vpop.f32.mrb[0].mxu0
    %v250 = vadd.f32 0.0, %v249
    %v251 = vpop.f32.mrb[0].mxu0
    %252 = vmatprep.mubr.f32.mxu0 0.0
    %253 = vmatmul.mubr.f32.gmra.mrb[0].mxu0 %v136
    %v254 = vpop.f32.mrb[0].mxu0
    %v255 = vadd.f32 0.0, %v254
    %v256 = vpop.f32.mrb[0].mxu0
    %257 = vmatprep.mubr.f32.mxu0 0.0
    %258 = vmatmul.mubr.f32.gmra.mrb[0].mxu0 %v137
    %v259 = vpop.f32.mrb[0].mxu0
    %v260 = vadd.f32 0.0, %v259
    %v261 = vpop.f32.mrb[0].mxu0
    %262 = vmatprep.mubr.f32.mxu0 0.0
    %263 = vmatmul.mubr.f32.gmra.mrb[0].mxu0 %v138
    %v264 = vpop.f32.mrb[0].mxu0
    %v265 = vadd.f32 0.0, %v264
    %v266 = vpop.f32.mrb[0].mxu0
    %267 = vmatprep.mubr.f32.mxu0 0.0
    %268 = vmatmul.mubr.f32.gmra.mrb[0].mxu0 %v139
    %v269 = vpop.f32.mrb[0].mxu0
    %v270 = vadd.f32 0.0, %v269
    %v271 = vpop.f32.mrb[0].mxu0
    %272 = vmatprep.mubr.f32.mxu0 0.0
    %273 = vmatmul.mubr.f32.gmra.mrb[0].mxu0 %v140
    %v274 = vpop.f32.mrb[0].mxu0
    %v275 = vadd.f32 0.0, %v274
    %v276 = vpop.f32.mrb[0].mxu0
    %277 = vmatprep.mubr.f32.mxu0 0.0
    %278 = vmatmul.mubr.f32.gmra.mrb[0].mxu0 %v141
    %v279 = vpop.f32.mrb[0].mxu0
    %v280 = vadd.f32 0.0, %v279
    %v281 = vpop.f32.mrb[0].mxu0
    %282 = vmatprep.mubr.f32.mxu0 0.0
    %283 = vmatmul.mubr.f32.gmra.mrb[0].mxu0 %v142
    %v284 = vpop.f32.mrb[0].mxu0
    %v285 = vadd.f32 0.0, %v284
    %v286 = vpop.f32.mrb[0].mxu0
    %287 = vmatprep.mubr.f32.mxu0 0.0
    %288 = vmatmul.mubr.f32.gmra.mrb[0].mxu0 %v143
    %v289 = vpop.f32.mrb[0].mxu0
    %v290 = vadd.f32 0.0, %v289
    %v291 = vpop.f32.mrb[0].mxu0
    %292 = vmatprep.mubr.f32.mxu0 0.0
    %293 = vmatmul.mubr.f32.gmra.mrb[0].mxu0 %v144
    %v294 = vpop.f32.mrb[0].mxu0
    %v295 = vadd.f32 0.0, %v294
    %v296 = vpop.f32.mrb[0].mxu0
    %297 = vmatprep.mubr.f32.mxu0 0.0
    %298 = vmatmul.mubr.f32.gmra.mrb[0].mxu0 %v145
    %v299 = vpop.f32.mrb[0].mxu0
    %v300 = vadd.f32 0.0, %v299
    %v301 = vpop.f32.mrb[0].mxu0
    %302 = vmatprep.mubr.f32.mxu0 0.0
    %303 = vmatmul.mubr.f32.gmra.mrb[0].mxu0 %v146
    %v304 = vpop.f32.mrb[0].mxu0
    %v305 = vadd.f32 0.0, %v304
    %v306 = vpop.f32.mrb[0].mxu0
    %307 = vdwg.mxu0
    %v308 = vadd.f32 %v115, %v230
    %v309 = vadd.f32 %v116, %v235
    %v310 = vadd.f32 %v117, %v240
    %v311 = vadd.f32 %v118, %v245
    %v312 = vadd.f32 %v119, %v250
    %v313 = vadd.f32 %v120, %v255
    %v314 = vadd.f32 %v121, %v260
    %v315 = vadd.f32 %v122, %v265
    %v316 = vadd.f32 %v123, %v270
    %v317 = vadd.f32 %v124, %v275
    %v318 = vadd.f32 %v125, %v280
    %v319 = vadd.f32 %v126, %v285
    %v320 = vadd.f32 %v127, %v290
    %v321 = vadd.f32 %v128, %v295
    %v322 = vadd.f32 %v129, %v300
    %v323 = vadd.f32 %v130, %v305
    %324 = vst [vmem:[#allocation2] sm:$0xff] %v308
    %325 = vst [vmem:[#allocation2 + $0x8] sm:$0xff] %v309
    %326 = vst [vmem:[#allocation2 + $0x10] sm:$0xff] %v310
    %327 = vst [vmem:[#allocation2 + $0x18] sm:$0xff] %v311
    %328 = vst [vmem:[#allocation2 + $0x20] sm:$0xff] %v312
    %329 = vst [vmem:[#allocation2 + $0x28] sm:$0xff] %v313
    %330 = vst [vmem:[#allocation2 + $0x30] sm:$0xff] %v314
    %331 = vst [vmem:[#allocation2 + $0x38] sm:$0xff] %v315
    %332 = vst [vmem:[#allocation2 + $0x40] sm:$0xff] %v316
    %333 = vst [vmem:[#allocation2 + $0x48] sm:$0xff] %v317
    %334 = vst [vmem:[#allocation2 + $0x50] sm:$0xff] %v318
    %335 = vst [vmem:[#allocation2 + $0x58] sm:$0xff] %v319
    %336 = vst [vmem:[#allocation2 + $0x60] sm:$0xff] %v320
    %337 = vst [vmem:[#allocation2 + $0x68] sm:$0xff] %v321
    %338 = vst [vmem:[#allocation2 + $0x70] sm:$0xff] %v322
    %339 = vst [vmem:[#allocation2 + $0x78] sm:$0xff] %v323
    // Predicated region
    $region54: #{tpu_custom_call.1} parent=1 // pred_check
      %p340 = pneg %p95
    $region55: #{tpu_custom_call.1} parent=1 // pred_check_branch
      %342 = sbr.rel (%p340) target = $region57
    $region56: #{tpu_custom_call.1} parent=1 // pred_region
      %v343 = vld [vmem:[#allocation2] sm:$0xff]
      %v344 = vld [vmem:[#allocation2 + $0x8] sm:$0xff]
      %v345 = vld [vmem:[#allocation2 + $0x10] sm:$0xff]
      %v346 = vld [vmem:[#allocation2 + $0x18] sm:$0xff]
      %v347 = vld [vmem:[#allocation2 + $0x20] sm:$0xff]
      %v348 = vld [vmem:[#allocation2 + $0x28] sm:$0xff]
      %v349 = vld [vmem:[#allocation2 + $0x30] sm:$0xff]
      %v350 = vld [vmem:[#allocation2 + $0x38] sm:$0xff]
      %v351 = vld [vmem:[#allocation2 + $0x40] sm:$0xff]
      %v352 = vld [vmem:[#allocation2 + $0x48] sm:$0xff]
      %v353 = vld [vmem:[#allocation2 + $0x50] sm:$0xff]
      %v354 = vld [vmem:[#allocation2 + $0x58] sm:$0xff]
      %v355 = vld [vmem:[#allocation2 + $0x60] sm:$0xff]
      %v356 = vld [vmem:[#allocation2 + $0x68] sm:$0xff]
      %v357 = vld [vmem:[#allocation2 + $0x70] sm:$0xff]
      %v358 = vld [vmem:[#allocation2 + $0x78] sm:$0xff]
      %v359 = vld [vmem:[#allocation8] sm:$0xff]
      %v360 = vld [vmem:[#allocation8 + $0x8] sm:$0xff]
      %v361 = vld [vmem:[#allocation8 + $0x10] sm:$0xff]
      %v362 = vld [vmem:[#allocation8 + $0x18] sm:$0xff]
      %v363 = vld [vmem:[#allocation8 + $0x20] sm:$0xff]
      %v364 = vld [vmem:[#allocation8 + $0x28] sm:$0xff]
      %v365 = vld [vmem:[#allocation8 + $0x30] sm:$0xff]
      %v366 = vld [vmem:[#allocation8 + $0x38] sm:$0xff]
      %v367 = vld [vmem:[#allocation8 + $0x40] sm:$0xff]
      %v368 = vld [vmem:[#allocation8 + $0x48] sm:$0xff]
      %v369 = vld [vmem:[#allocation8 + $0x50] sm:$0xff]
      %v370 = vld [vmem:[#allocation8 + $0x58] sm:$0xff]
      %v371 = vld [vmem:[#allocation8 + $0x60] sm:$0xff]
      %v372 = vld [vmem:[#allocation8 + $0x68] sm:$0xff]
      %v373 = vld [vmem:[#allocation8 + $0x70] sm:$0xff]
      %v374 = vld [vmem:[#allocation8 + $0x78] sm:$0xff]
      %v375 = vadd.f32 %v343, %v359
      %v376 = vadd.f32 %v344, %v360
      %v377 = vadd.f32 %v345, %v361
      %v378 = vadd.f32 %v346, %v362
      %v379 = vadd.f32 %v347, %v363
      %v380 = vadd.f32 %v348, %v364
      %v381 = vadd.f32 %v349, %v365
      %v382 = vadd.f32 %v350, %v366
      %v383 = vadd.f32 %v351, %v367
      %v384 = vadd.f32 %v352, %v368
      %v385 = vadd.f32 %v353, %v369
      %v386 = vadd.f32 %v354, %v370
      %v387 = vadd.f32 %v355, %v371
      %v388 = vadd.f32 %v356, %v372
      %v389 = vadd.f32 %v357, %v373
      %v390 = vadd.f32 %v358, %v374
      %v391 = vld [vmem:[#allocation9] sm:$0xff]
      %v392 = vld [vmem:[#allocation9 + $0x8] sm:$0xff]
      %v393 = vld [vmem:[#allocation9 + $0x10] sm:$0xff]
      %v394 = vld [vmem:[#allocation9 + $0x18] sm:$0xff]
      %v395 = vld [vmem:[#allocation9 + $0x20] sm:$0xff]
      %v396 = vld [vmem:[#allocation9 + $0x28] sm:$0xff]
      %v397 = vld [vmem:[#allocation9 + $0x30] sm:$0xff]
      %v398 = vld [vmem:[#allocation9 + $0x38] sm:$0xff]
      %v399 = vld [vmem:[#allocation9 + $0x40] sm:$0xff]
      %v400 = vld [vmem:[#allocation9 + $0x48] sm:$0xff]
      %v401 = vld [vmem:[#allocation9 + $0x50] sm:$0xff]
      %v402 = vld [vmem:[#allocation9 + $0x58] sm:$0xff]
      %v403 = vld [vmem:[#allocation9 + $0x60] sm:$0xff]
      %v404 = vld [vmem:[#allocation9 + $0x68] sm:$0xff]
      %v405 = vld [vmem:[#allocation9 + $0x70] sm:$0xff]
      %v406 = vld [vmem:[#allocation9 + $0x78] sm:$0xff]
      %v407 = vld [vmem:[%s4] sm:$0x1]
      %v409 = vlaneseq
      %v410 = vshrl.u32 %v409, 7
      %v411 = vsub.s32 0, %v410
      %v412 = vrot.slane %v407, %v411
      %414 = vmatprep.subr.mxu0 0.0
      %415 = vmatpush1.msra.mxu0 %v391
      %416 = vmatprep.subr.mxu0 0.0
      %417 = vmatpush1.msra.mxu0 %v392
      %418 = vmatprep.subr.mxu0 0.0
      %419 = vmatpush1.msra.mxu0 %v393
      %420 = vmatprep.subr.mxu0 0.0
      %421 = vmatpush1.msra.mxu0 %v394
      %422 = vmatprep.subr.mxu0 0.0
      %423 = vmatpush1.msra.mxu0 %v395
      %424 = vmatprep.subr.mxu0 0.0
      %425 = vmatpush1.msra.mxu0 %v396
      %426 = vmatprep.subr.mxu0 0.0
      %427 = vmatpush1.msra.mxu0 %v397
      %428 = vmatprep.subr.mxu0 0.0
      %429 = vmatpush1.msra.mxu0 %v398
      %430 = vmatprep.subr.mxu0 0.0
      %431 = vmatpush1.msra.mxu0 %v399
      %432 = vmatprep.subr.mxu0 0.0
      %433 = vmatpush1.msra.mxu0 %v400
      %434 = vmatprep.subr.mxu0 0.0
      %435 = vmatpush1.msra.mxu0 %v401
      %436 = vmatprep.subr.mxu0 0.0
      %437 = vmatpush1.msra.mxu0 %v402
      %438 = vmatprep.subr.mxu0 0.0
      %439 = vmatpush1.msra.mxu0 %v403
      %440 = vmatprep.subr.mxu0 0.0
      %441 = vmatpush1.msra.mxu0 %v404
      %442 = vmatprep.subr.mxu0 0.0
      %443 = vmatpush1.msra.mxu0 %v405
      %444 = vmatprep.subr.mxu0 0.0
      %445 = vmatpush1.msra.mxu0 %v406
      %446 = vmatprep.subr.mxu0 0.0
      %447 = vmatpush1.msra.mxu0 0.0
      %448 = vmatprep.subr.mxu0 0.0
      %449 = vmatpush1.msra.mxu0 0.0
      %450 = vmatprep.subr.mxu0 0.0
      %451 = vmatpush1.msra.mxu0 0.0
      %452 = vmatprep.subr.mxu0 0.0
      %453 = vmatpush1.msra.mxu0 0.0
      %454 = vmatprep.subr.mxu0 0.0
      %455 = vmatpush1.msra.mxu0 0.0
      %456 = vmatprep.subr.mxu0 0.0
      %457 = vmatpush1.msra.mxu0 0.0
      %458 = vmatprep.subr.mxu0 0.0
      %459 = vmatpush1.msra.mxu0 0.0
      %460 = vmatprep.subr.mxu0 0.0
      %461 = vmatpush1.msra.mxu0 0.0
      %462 = vmatprep.subr.mxu0 0.0
      %463 = vmatpush1.msra.mxu0 0.0
      %464 = vmatprep.subr.mxu0 0.0
      %465 = vmatpush1.msra.mxu0 0.0
      %466 = vmatprep.subr.mxu0 0.0
      %467 = vmatpush1.msra.mxu0 0.0
      %468 = vmatprep.subr.mxu0 0.0
      %469 = vmatpush1.msra.mxu0 0.0
      %470 = vmatprep.subr.mxu0 0.0
      %471 = vmatpush1.msra.mxu0 0.0
      %472 = vmatprep.subr.mxu0 0.0
      %473 = vmatpush1.msra.mxu0 0.0
      %474 = vmatprep.subr.mxu0 0.0
      %475 = vmatpush1.msra.mxu0 0.0
      %476 = vmatprep.subr.mxu0 0.0
      %477 = vmatpush1.msra.mxu0 0.0
      %478 = vmatprep.mubr.f32.mxu0 0.0
      %479 = vmatmul.mubr.f32.gmra.mrb[0].mxu0 %v375
      %v480 = vpop.f32.mrb[0].mxu0
      %v481 = vadd.f32 %v412, %v480
      %v482 = vpop.f32.mrb[0].mxu0
      %483 = vmatprep.mubr.f32.mxu0 0.0
      %484 = vmatmul.mubr.f32.gmra.mrb[0].mxu0 %v376
      %v485 = vpop.f32.mrb[0].mxu0
      %v486 = vadd.f32 %v412, %v485
      %v487 = vpop.f32.mrb[0].mxu0
      %488 = vmatprep.mubr.f32.mxu0 0.0
      %489 = vmatmul.mubr.f32.gmra.mrb[0].mxu0 %v377
      %v490 = vpop.f32.mrb[0].mxu0
      %v491 = vadd.f32 %v412, %v490
      %v492 = vpop.f32.mrb[0].mxu0
      %493 = vmatprep.mubr.f32.mxu0 0.0
      %494 = vmatmul.mubr.f32.gmra.mrb[0].mxu0 %v378
      %v495 = vpop.f32.mrb[0].mxu0
      %v496 = vadd.f32 %v412, %v495
      %v497 = vpop.f32.mrb[0].mxu0
      %498 = vmatprep.mubr.f32.mxu0 0.0
      %499 = vmatmul.mubr.f32.gmra.mrb[0].mxu0 %v379
      %v500 = vpop.f32.mrb[0].mxu0
      %v501 = vadd.f32 %v412, %v500
      %v502 = vpop.f32.mrb[0].mxu0
      %503 = vmatprep.mubr.f32.mxu0 0.0
      %504 = vmatmul.mubr.f32.gmra.mrb[0].mxu0 %v380
      %v505 = vpop.f32.mrb[0].mxu0
      %v506 = vadd.f32 %v412, %v505
      %v507 = vpop.f32.mrb[0].mxu0
      %508 = vmatprep.mubr.f32.mxu0 0.0
      %509 = vmatmul.mubr.f32.gmra.mrb[0].mxu0 %v381
      %v510 = vpop.f32.mrb[0].mxu0
      %v511 = vadd.f32 %v412, %v510
      %v512 = vpop.f32.mrb[0].mxu0
      %513 = vmatprep.mubr.f32.mxu0 0.0
      %514 = vmatmul.mubr.f32.gmra.mrb[0].mxu0 %v382
      %v515 = vpop.f32.mrb[0].mxu0
      %v516 = vadd.f32 %v412, %v515
      %v517 = vpop.f32.mrb[0].mxu0
      %518 = vmatprep.mubr.f32.mxu0 0.0
      %519 = vmatmul.mubr.f32.gmra.mrb[0].mxu0 %v383
      %v520 = vpop.f32.mrb[0].mxu0
      %v521 = vadd.f32 %v412, %v520
      %v522 = vpop.f32.mrb[0].mxu0
      %523 = vmatprep.mubr.f32.mxu0 0.0
      %524 = vmatmul.mubr.f32.gmra.mrb[0].mxu0 %v384
      %v525 = vpop.f32.mrb[0].mxu0
      %v526 = vadd.f32 %v412, %v525
      %v527 = vpop.f32.mrb[0].mxu0
      %528 = vmatprep.mubr.f32.mxu0 0.0
      %529 = vmatmul.mubr.f32.gmra.mrb[0].mxu0 %v385
      %v530 = vpop.f32.mrb[0].mxu0
      %v531 = vadd.f32 %v412, %v530
      %v532 = vpop.f32.mrb[0].mxu0
      %533 = vmatprep.mubr.f32.mxu0 0.0
      %534 = vmatmul.mubr.f32.gmra.mrb[0].mxu0 %v386
      %v535 = vpop.f32.mrb[0].mxu0
      %v536 = vadd.f32 %v412, %v535
      %v537 = vpop.f32.mrb[0].mxu0
      %538 = vmatprep.mubr.f32.mxu0 0.0
      %539 = vmatmul.mubr.f32.gmra.mrb[0].mxu0 %v387
      %v540 = vpop.f32.mrb[0].mxu0
      %v541 = vadd.f32 %v412, %v540
      %v542 = vpop.f32.mrb[0].mxu0
      %543 = vmatprep.mubr.f32.mxu0 0.0
      %544 = vmatmul.mubr.f32.gmra.mrb[0].mxu0 %v388
      %v545 = vpop.f32.mrb[0].mxu0
      %v546 = vadd.f32 %v412, %v545
      %v547 = vpop.f32.mrb[0].mxu0
      %548 = vmatprep.mubr.f32.mxu0 0.0
      %549 = vmatmul.mubr.f32.gmra.mrb[0].mxu0 %v389
      %v550 = vpop.f32.mrb[0].mxu0
      %v551 = vadd.f32 %v412, %v550
      %v552 = vpop.f32.mrb[0].mxu0
      %553 = vmatprep.mubr.f32.mxu0 0.0
      %554 = vmatmul.mubr.f32.gmra.mrb[0].mxu0 %v390
      %v555 = vpop.f32.mrb[0].mxu0
      %v556 = vadd.f32 %v412, %v555
      %v557 = vpop.f32.mrb[0].mxu0
      %558 = vdwg.mxu0
      %v559 = vmax.f32 %v481, 0.0
      %v560 = vmax.f32 %v486, 0.0
      %v561 = vmax.f32 %v491, 0.0
      %v562 = vmax.f32 %v496, 0.0
      %v563 = vmax.f32 %v501, 0.0
      %v564 = vmax.f32 %v506, 0.0
      %v565 = vmax.f32 %v511, 0.0
      %v566 = vmax.f32 %v516, 0.0
      %v567 = vmax.f32 %v521, 0.0
      %v568 = vmax.f32 %v526, 0.0
      %v569 = vmax.f32 %v531, 0.0
      %v570 = vmax.f32 %v536, 0.0
      %v571 = vmax.f32 %v541, 0.0
      %v572 = vmax.f32 %v546, 0.0
      %v573 = vmax.f32 %v551, 0.0
      %v574 = vmax.f32 %v556, 0.0
      %v575 = vld [vmem:[#allocation11] sm:$0xff]
      %v576 = vld [vmem:[#allocation11 + $0x8] sm:$0xff]
      %v577 = vld [vmem:[#allocation11 + $0x10] sm:$0xff]
      %v578 = vld [vmem:[#allocation11 + $0x18] sm:$0xff]
      %v579 = vld [vmem:[#allocation11 + $0x20] sm:$0xff]
      %v580 = vld [vmem:[#allocation11 + $0x28] sm:$0xff]
      %v581 = vld [vmem:[#allocation11 + $0x30] sm:$0xff]
      %v582 = vld [vmem:[#allocation11 + $0x38] sm:$0xff]
      %v583 = vld [vmem:[#allocation11 + $0x40] sm:$0xff]
      %v584 = vld [vmem:[#allocation11 + $0x48] sm:$0xff]
      %v585 = vld [vmem:[#allocation11 + $0x50] sm:$0xff]
      %v586 = vld [vmem:[#allocation11 + $0x58] sm:$0xff]
      %v587 = vld [vmem:[#allocation11 + $0x60] sm:$0xff]
      %v588 = vld [vmem:[#allocation11 + $0x68] sm:$0xff]
      %v589 = vld [vmem:[#allocation11 + $0x70] sm:$0xff]
      %v590 = vld [vmem:[#allocation11 + $0x78] sm:$0xff]
      %v591 = vld [vmem:[%s6] sm:$0x1]
      %v593 = vlaneseq
      %v594 = vshrl.u32 %v593, 7
      %v595 = vsub.s32 0, %v594
      %v596 = vrot.slane %v591, %v595
      %598 = vmatprep.subr.mxu0 0.0
      %599 = vmatpush1.msra.mxu0 %v575
      %600 = vmatprep.subr.mxu0 0.0
      %601 = vmatpush1.msra.mxu0 %v576
      %602 = vmatprep.subr.mxu0 0.0
      %603 = vmatpush1.msra.mxu0 %v577
      %604 = vmatprep.subr.mxu0 0.0
      %605 = vmatpush1.msra.mxu0 %v578
      %606 = vmatprep.subr.mxu0 0.0
      %607 = vmatpush1.msra.mxu0 %v579
      %608 = vmatprep.subr.mxu0 0.0
      %609 = vmatpush1.msra.mxu0 %v580
      %610 = vmatprep.subr.mxu0 0.0
      %611 = vmatpush1.msra.mxu0 %v581
      %612 = vmatprep.subr.mxu0 0.0
      %613 = vmatpush1.msra.mxu0 %v582
      %614 = vmatprep.subr.mxu0 0.0
      %615 = vmatpush1.msra.mxu0 %v583
      %616 = vmatprep.subr.mxu0 0.0
      %617 = vmatpush1.msra.mxu0 %v584
      %618 = vmatprep.subr.mxu0 0.0
      %619 = vmatpush1.msra.mxu0 %v585
      %620 = vmatprep.subr.mxu0 0.0
      %621 = vmatpush1.msra.mxu0 %v586
      %622 = vmatprep.subr.mxu0 0.0
      %623 = vmatpush1.msra.mxu0 %v587
      %624 = vmatprep.subr.mxu0 0.0
      %625 = vmatpush1.msra.mxu0 %v588
      %626 = vmatprep.subr.mxu0 0.0
      %627 = vmatpush1.msra.mxu0 %v589
      %628 = vmatprep.subr.mxu0 0.0
      %629 = vmatpush1.msra.mxu0 %v590
      %630 = vmatprep.subr.mxu0 0.0
      %631 = vmatpush1.msra.mxu0 0.0
      %632 = vmatprep.subr.mxu0 0.0
      %633 = vmatpush1.msra.mxu0 0.0
      %634 = vmatprep.subr.mxu0 0.0
      %635 = vmatpush1.msra.mxu0 0.0
      %636 = vmatprep.subr.mxu0 0.0
      %637 = vmatpush1.msra.mxu0 0.0
      %638 = vmatprep.subr.mxu0 0.0
      %639 = vmatpush1.msra.mxu0 0.0
      %640 = vmatprep.subr.mxu0 0.0
      %641 = vmatpush1.msra.mxu0 0.0
      %642 = vmatprep.subr.mxu0 0.0
      %643 = vmatpush1.msra.mxu0 0.0
      %644 = vmatprep.subr.mxu0 0.0
      %645 = vmatpush1.msra.mxu0 0.0
      %646 = vmatprep.subr.mxu0 0.0
      %647 = vmatpush1.msra.mxu0 0.0
      %648 = vmatprep.subr.mxu0 0.0
      %649 = vmatpush1.msra.mxu0 0.0
      %650 = vmatprep.subr.mxu0 0.0
      %651 = vmatpush1.msra.mxu0 0.0
      %652 = vmatprep.subr.mxu0 0.0
      %653 = vmatpush1.msra.mxu0 0.0
      %654 = vmatprep.subr.mxu0 0.0
      %655 = vmatpush1.msra.mxu0 0.0
      %656 = vmatprep.subr.mxu0 0.0
      %657 = vmatpush1.msra.mxu0 0.0
      %658 = vmatprep.subr.mxu0 0.0
      %659 = vmatpush1.msra.mxu0 0.0
      %660 = vmatprep.subr.mxu0 0.0
      %661 = vmatpush1.msra.mxu0 0.0
      %662 = vmatprep.mubr.f32.mxu0 0.0
      %663 = vmatmul.mubr.f32.gmra.mrb[0].mxu0 %v559
      %v664 = vpop.f32.mrb[0].mxu0
      %v665 = vadd.f32 %v596, %v664
      %v666 = vpop.f32.mrb[0].mxu0
      %667 = vmatprep.mubr.f32.mxu0 0.0
      %668 = vmatmul.mubr.f32.gmra.mrb[0].mxu0 %v560
      %v669 = vpop.f32.mrb[0].mxu0
      %v670 = vadd.f32 %v596, %v669
      %v671 = vpop.f32.mrb[0].mxu0
      %672 = vmatprep.mubr.f32.mxu0 0.0
      %673 = vmatmul.mubr.f32.gmra.mrb[0].mxu0 %v561
      %v674 = vpop.f32.mrb[0].mxu0
      %v675 = vadd.f32 %v596, %v674
      %v676 = vpop.f32.mrb[0].mxu0
      %677 = vmatprep.mubr.f32.mxu0 0.0
      %678 = vmatmul.mubr.f32.gmra.mrb[0].mxu0 %v562
      %v679 = vpop.f32.mrb[0].mxu0
      %v680 = vadd.f32 %v596, %v679
      %v681 = vpop.f32.mrb[0].mxu0
      %682 = vmatprep.mubr.f32.mxu0 0.0
      %683 = vmatmul.mubr.f32.gmra.mrb[0].mxu0 %v563
      %v684 = vpop.f32.mrb[0].mxu0
      %v685 = vadd.f32 %v596, %v684
      %v686 = vpop.f32.mrb[0].mxu0
      %687 = vmatprep.mubr.f32.mxu0 0.0
      %688 = vmatmul.mubr.f32.gmra.mrb[0].mxu0 %v564
      %v689 = vpop.f32.mrb[0].mxu0
      %v690 = vadd.f32 %v596, %v689
      %v691 = vpop.f32.mrb[0].mxu0
      %692 = vmatprep.mubr.f32.mxu0 0.0
      %693 = vmatmul.mubr.f32.gmra.mrb[0].mxu0 %v565
      %v694 = vpop.f32.mrb[0].mxu0
      %v695 = vadd.f32 %v596, %v694
      %v696 = vpop.f32.mrb[0].mxu0
      %697 = vmatprep.mubr.f32.mxu0 0.0
      %698 = vmatmul.mubr.f32.gmra.mrb[0].mxu0 %v566
      %v699 = vpop.f32.mrb[0].mxu0
      %v700 = vadd.f32 %v596, %v699
      %v701 = vpop.f32.mrb[0].mxu0
      %702 = vmatprep.mubr.f32.mxu0 0.0
      %703 = vmatmul.mubr.f32.gmra.mrb[0].mxu0 %v567
      %v704 = vpop.f32.mrb[0].mxu0
      %v705 = vadd.f32 %v596, %v704
      %v706 = vpop.f32.mrb[0].mxu0
      %707 = vmatprep.mubr.f32.mxu0 0.0
      %708 = vmatmul.mubr.f32.gmra.mrb[0].mxu0 %v568
      %v709 = vpop.f32.mrb[0].mxu0
      %v710 = vadd.f32 %v596, %v709
      %v711 = vpop.f32.mrb[0].mxu0
      %712 = vmatprep.mubr.f32.mxu0 0.0
      %713 = vmatmul.mubr.f32.gmra.mrb[0].mxu0 %v569
      %v714 = vpop.f32.mrb[0].mxu0
      %v715 = vadd.f32 %v596, %v714
      %v716 = vpop.f32.mrb[0].mxu0
      %717 = vmatprep.mubr.f32.mxu0 0.0
      %718 = vmatmul.mubr.f32.gmra.mrb[0].mxu0 %v570
      %v719 = vpop.f32.mrb[0].mxu0
      %v720 = vadd.f32 %v596, %v719
      %v721 = vpop.f32.mrb[0].mxu0
      %722 = vmatprep.mubr.f32.mxu0 0.0
      %723 = vmatmul.mubr.f32.gmra.mrb[0].mxu0 %v571
      %v724 = vpop.f32.mrb[0].mxu0
      %v725 = vadd.f32 %v596, %v724
      %v726 = vpop.f32.mrb[0].mxu0
      %727 = vmatprep.mubr.f32.mxu0 0.0
      %728 = vmatmul.mubr.f32.gmra.mrb[0].mxu0 %v572
      %v729 = vpop.f32.mrb[0].mxu0
      %v730 = vadd.f32 %v596, %v729
      %v731 = vpop.f32.mrb[0].mxu0
      %732 = vmatprep.mubr.f32.mxu0 0.0
      %733 = vmatmul.mubr.f32.gmra.mrb[0].mxu0 %v573
      %v734 = vpop.f32.mrb[0].mxu0
      %v735 = vadd.f32 %v596, %v734
      %v736 = vpop.f32.mrb[0].mxu0
      %737 = vmatprep.mubr.f32.mxu0 0.0
      %738 = vmatmul.mubr.f32.gmra.mrb[0].mxu0 %v574
      %v739 = vpop.f32.mrb[0].mxu0
      %v740 = vadd.f32 %v596, %v739
      %v741 = vpop.f32.mrb[0].mxu0
      %742 = vdwg.mxu0
      %743 = vst [vmem:[#allocation12] sm:$0xff] %v665
      %744 = vst [vmem:[#allocation12 + $0x8] sm:$0xff] %v670
      %745 = vst [vmem:[#allocation12 + $0x10] sm:$0xff] %v675
      %746 = vst [vmem:[#allocation12 + $0x18] sm:$0xff] %v680
      %747 = vst [vmem:[#allocation12 + $0x20] sm:$0xff] %v685
      %748 = vst [vmem:[#allocation12 + $0x28] sm:$0xff] %v690
      %749 = vst [vmem:[#allocation12 + $0x30] sm:$0xff] %v695
      %750 = vst [vmem:[#allocation12 + $0x38] sm:$0xff] %v700
      %751 = vst [vmem:[#allocation12 + $0x40] sm:$0xff] %v705
      %752 = vst [vmem:[#allocation12 + $0x48] sm:$0xff] %v710
      %753 = vst [vmem:[#allocation12 + $0x50] sm:$0xff] %v715
      %754 = vst [vmem:[#allocation12 + $0x58] sm:$0xff] %v720
      %755 = vst [vmem:[#allocation12 + $0x60] sm:$0xff] %v725
      %756 = vst [vmem:[#allocation12 + $0x68] sm:$0xff] %v730
      %757 = vst [vmem:[#allocation12 + $0x70] sm:$0xff] %v735
      %758 = vst [vmem:[#allocation12 + $0x78] sm:$0xff] %v740
    $region57: #{tpu_custom_call.1} parent=1 // pred_fallthru
      _
    // Predicated region
    $region58: #{tpu_custom_call.1} parent=1 // pred_check
      _
    $region59: #{tpu_custom_call.1} parent=1 // pred_check_branch
      %760 = sbr.rel (0) target = $region61
    $region60: #{tpu_custom_call.1} parent=1 // pred_region
      %s762 = ssub.s32 2048, 2048
      %763 = vsyncadd [#allocation5], %s762
      %s764 = sshll.u32 [#allocation12], 4
      %s765 = int_to_ptr.vmem [resolvable:$true] %s764
      %770 = dma.vmem_to_hbm [thread:$0]  %s765, 2048, %s7, [#allocation5], 128, 128, 8
    $region61: #{tpu_custom_call.1} parent=1 // pred_fallthru
      _
    // Predicated region
    $region62: #{tpu_custom_call.1} parent=1 // pred_check
      _
    $region63: #{tpu_custom_call.1} parent=1 // pred_check_branch
      %772 = sbr.rel (0) target = $region65
    $region64: #{tpu_custom_call.1} parent=1 // pred_region
      %773 = dma.done [#allocation5], 2048
    $region65: #{tpu_custom_call.1} parent=1 // pred_fallthru
      _
    %774 = vsyncpa [#allocation4], 1
    %775 = vsyncpa [#allocation7], 1
    %776 = vsyncpa [#allocation10], 1
    %777 = vsyncpa [#allocation5], 1

</llo_original>
